<compile_context>
chip_gen: v7x
topology: tpu7x:2x2x1
jax: 0.10.0
libtpu: 0.0.40
codegen_flags: <defaults>
</compile_context>

<pallas_src>
import functools

import jax
import jax.numpy as jnp
from jax.experimental import pallas as pl
from jax.experimental.pallas import tpu as pltpu

WAVE_MULTIPLIER = 64.0
_LANE = 128
_SUBLANE = 8
_MAX_ROW_TILE = 2048       # out block 2048x64xf32 x2buf = 1 MiB; far under VMEM limits
_MIN_GRID_STEPS = 2        # let the "parallel" axis shard across both v7x TCs


def _round_up(x, m):
    return ((x + m - 1) // m) * m


def _choose_tile(rows, max_tile=_MAX_ROW_TILE, min_steps=_MIN_GRID_STEPS):
    """Balanced row tiles: minimize padding, keep >=min_steps grid steps."""
    n_tiles = max(-(-rows // max_tile), 1)
    if n_tiles < min_steps and rows > _SUBLANE:
        n_tiles = min_steps
    tile = max(_round_up(-(-rows // n_tiles), _SUBLANE), _SUBLANE)
    rows_p = _round_up(rows, tile)
    return tile, rows_p


def _hps_fused_kernel(wave_ref,        # VMEM (T, 1)    f32  wave/(1+z), pre-shifted
                      spatial_ref,     # VMEM (T, C)    f32  broadcast spatial latents
                      w0_ref, b0_ref,  # VMEM (1, Hp)   f32  (affine norm folded in)
                      w1_ref,          # VMEM (Hp, Hp)  bf16
                      b1_ref,          # VMEM (1, Hp)   f32
                      w2_ref,          # VMEM (Hp, E)   bf16
                      b2_ref,          # VMEM (1, E)    f32
                      out_ref,         # VMEM (T, C+E)  f32  fused [spatial | embed]
                      *, coords_dim):
    # layer 0: contraction dim is 1 -> VPU broadcast multiply, stays f32
    h = jnp.maximum(wave_ref[...] * w0_ref[...] + b0_ref[...], 0.0)          # (T, Hp)
    # layers 1 & 2 on the MXU with bf16 operands, f32 accumulate
    h = jnp.maximum(
        jnp.dot(h.astype(jnp.bfloat16), w1_ref[...],
                preferred_element_type=jnp.float32) + b1_ref[...], 0.0)      # (T, Hp)
    emb = jnp.dot(h.astype(jnp.bfloat16), w2_ref[...],
                  preferred_element_type=jnp.float32) + b2_ref[...]          # (T, E)
    # combine_spatial_spectral('concat') fused into the output block
    out_ref[:, :coords_dim] = spatial_ref[...]
    out_ref[:, coords_dim:] = emb


def hyperspectral_converter(wave, latents, redshift, wave_bound, params,
                            wave_multiplier=WAVE_MULTIPLIER):
    """Pallas implementation of HyperSpectralConverter.forward (relumlp + concat)."""
    bsz, nsmpl, _ = wave.shape
    coords_dim = latents.shape[-1]
    w0, b0, w1, b1, w2, b2 = params
    hidden = w1.shape[0]
    embed_dim = w2.shape[1]
    out_dim = coords_dim + embed_dim
    lo, hi = float(wave_bound[0]), float(wave_bound[1])
    scale = float(wave_multiplier) / (hi - lo)

    rows = bsz * nsmpl
    tile, rows_p = _choose_tile(rows)
    pad_r = rows_p - rows
    h_p = _round_up(hidden, _LANE)

    # shift_wave folded into the single small input stream (one fused XLA op)
    wave_flat = (wave.astype(jnp.float32)
                 / (1.0 + redshift.astype(jnp.float32))[:, None, None]
                 ).reshape(rows, 1)
    wave_flat = jnp.pad(wave_flat, ((0, pad_r), (0, 0)))

    # latents.tile(1, nsmpl, 1) as a per-row spatial stream (concat fused in-kernel)
    spatial = jnp.broadcast_to(latents.astype(jnp.float32),
                               (bsz, nsmpl, coords_dim)).reshape(rows, coords_dim)
    spatial = jnp.pad(spatial, ((0, pad_r), (0, 0)))

    # fold linear_norm_wave into layer-0 weights:
    #   relu(scale*(w - lo) @ w0 + b0) == relu(w * (scale*w0) + (b0 - lo*scale*w0))
    # zero-padded hidden lanes stay exactly 0 through ReLU and the padded w1/w2 rows.
    w0p = jnp.pad(scale * w0, ((0, 0), (0, h_p - hidden))).astype(jnp.float32)
    b0p = jnp.pad(b0 - lo * scale * w0, ((0, 0), (0, h_p - hidden))).astype(jnp.float32)
    w1p = jnp.pad(w1, ((0, h_p - hidden), (0, h_p - hidden))).astype(jnp.bfloat16)
    b1p = jnp.pad(b1, ((0, 0), (0, h_p - hidden))).astype(jnp.float32)
    w2p = jnp.pad(w2, ((0, h_p - hidden), (0, 0))).astype(jnp.bfloat16)
    b2p = b2.astype(jnp.float32)

    kernel = functools.partial(_hps_fused_kernel, coords_dim=coords_dim)
    const = lambda i: (0, 0)   # weights: same full block every grid step (no re-DMA)

    out_flat = pl.pallas_call(
        kernel,
        grid=(rows_p // tile,),
        in_specs=[
            pl.BlockSpec((tile, 1), lambda i: (i, 0)),           # wave/(1+z)
            pl.BlockSpec((tile, coords_dim), lambda i: (i, 0)),  # spatial latents
            pl.BlockSpec((1, h_p), const),                       # w0'
            pl.BlockSpec((1, h_p), const),                       # b0'
            pl.BlockSpec((h_p, h_p), const),                     # w1 (bf16)
            pl.BlockSpec((1, h_p), const),                       # b1
            pl.BlockSpec((h_p, embed_dim), const),               # w2 (bf16)
            pl.BlockSpec((1, embed_dim), const),                 # b2
        ],
        out_specs=pl.BlockSpec((tile, out_dim), lambda i: (i, 0)),
        out_shape=jax.ShapeDtypeStruct((rows_p, out_dim), jnp.float32),
        compiler_params=pltpu.CompilerParams(
            dimension_semantics=("parallel",)),
    )(wave_flat, spatial, w0p, b0p, w1p, b1p, w2p, b2p)

    return out_flat[:rows].reshape(bsz, nsmpl, out_dim)


def init_relumlp_params(key, hidden, embed_dim):
    """Deterministic nn.Linear-style init: U(-1/sqrt(fan_in), 1/sqrt(fan_in))."""
    ks = jax.random.split(key, 6)
    def lin(kw, kb, fan_in, fan_out):
        bound = 1.0 / jnp.sqrt(fan_in)
        w = jax.random.uniform(kw, (fan_in, fan_out), jnp.float32, -bound, bound)
        b = jax.random.uniform(kb, (1, fan_out), jnp.float32, -bound, bound)
        return w, b
    w0, b0 = lin(ks[0], ks[1], 1, hidden)
    w1, b1 = lin(ks[2], ks[3], hidden, hidden)
    w2, b2 = lin(ks[4], ks[5], hidden, embed_dim)
    return (w0, b0, w1, b1, w2, b2)


def reference_forward(wave, latents, redshift, wave_bound, params,
                      wave_multiplier=WAVE_MULTIPLIER):
    """Pure-f32 JAX reference mirroring the PyTorch forward (relumlp + concat)."""
    lo, hi = wave_bound
    w0, b0, w1, b1, w2, b2 = params
    nsmpl = wave.shape[1]
    w = wave / (1.0 + redshift)[:, None, None]
    w = wave_multiplier * (w - lo) / (hi - lo)
    h = jax.nn.relu(w @ w0 + b0)
    h = jax.nn.relu(h @ w1 + b1)
    e = h @ w2 + b2
    spatial = jnp.tile(latents, (1, nsmpl, 1))
    return jnp.concatenate([spatial, e], axis=-1)


def reference_forward_bf16(wave, latents, redshift, wave_bound, params,
                           wave_multiplier=WAVE_MULTIPLIER):
    """Reference mirroring the kernel's bf16-operand / f32-accumulate matmuls."""
    lo, hi = wave_bound
    w0, b0, w1, b1, w2, b2 = params
    nsmpl = wave.shape[1]
    w = wave / (1.0 + redshift)[:, None, None]
    w = wave_multiplier * (w - lo) / (hi - lo)
    h = jax.nn.relu(w @ w0 + b0)
    h = jax.nn.relu(jnp.dot(h.astype(jnp.bfloat16), w1.astype(jnp.bfloat16),
                            preferred_element_type=jnp.float32) + b1)
    e = jnp.dot(h.astype(jnp.bfloat16), w2.astype(jnp.bfloat16),
                preferred_element_type=jnp.float32) + b2
    spatial = jnp.tile(latents, (1, nsmpl, 1))
    return jnp.concatenate([spatial, e], axis=-1)


if __name__ == "__main__":
    key = jax.random.PRNGKey(0)
    k_wave, k_lat, k_red, k_par = jax.random.split(key, 4)

    bsz, nsmpl = 2, 16
    coords_dim = 32          # coords_embed_dim (encoded RA/DEC latents)
    hidden = 32              # wave_encoder_hidden_dim
    embed_dim = 32           # wave_embed_dim
    wave_bound = (3000.0, 10000.0)

    wave = jax.random.uniform(k_wave, (bsz, nsmpl, 1), jnp.float32,
                              wave_bound[0], wave_bound[1])
    latents = jax.random.normal(k_lat, (bsz, 1, coords_dim), jnp.float32)
    redshift = jax.random.uniform(k_red, (bsz,), jnp.float32, 0.0, 0.5)
    params = init_relumlp_params(k_par, hidden, embed_dim)

    out = hyperspectral_converter(wave, latents, redshift, wave_bound, params)
    out = jax.block_until_ready(out)

    assert out.shape == (bsz, nsmpl, coords_dim + embed_dim), out.shape

    # spatial lanes are a straight copy -> exact
    spatial_ref = jnp.broadcast_to(latents, (bsz, nsmpl, coords_dim))
    assert jnp.array_equal(out[..., :coords_dim], spatial_ref)

    # tight check vs. a reference that mirrors the kernel's bf16 matmuls
    ref_bf16 = reference_forward_bf16(wave, latents, redshift, wave_bound, params)
    assert jnp.allclose(out, ref_bf16, rtol=1e-2, atol=1e-2), \
        float(jnp.max(jnp.abs(out - ref_bf16)))

    # loose check vs. the pure-f32 PyTorch-equivalent reference
    ref_f32 = reference_forward(wave, latents, redshift, wave_bound, params)
    rel_err = float(jnp.max(jnp.abs(out - ref_f32)) /
                    (jnp.max(jnp.abs(ref_f32)) + 1e-6))
    assert rel_err < 5e-2, rel_err

    print("KERNEL_OK")
</pallas_src>

<mosaic_0001>
module attributes {stable_mosaic.version = 11 : i64} {
  func.func @_hps_fused_kernel(%arg0: i32, %arg1: memref<16x1xf32, #tpu.memory_space<vmem>>, %arg2: memref<16x32xf32, #tpu.memory_space<vmem>>, %arg3: memref<1x128xf32, #tpu.memory_space<vmem>>, %arg4: memref<1x128xf32, #tpu.memory_space<vmem>>, %arg5: memref<128x128xbf16, #tpu.memory_space<vmem>>, %arg6: memref<1x128xf32, #tpu.memory_space<vmem>>, %arg7: memref<128x32xbf16, #tpu.memory_space<vmem>>, %arg8: memref<1x32xf32, #tpu.memory_space<vmem>>, %arg9: memref<16x64xf32, #tpu.memory_space<vmem>>) attributes {dimension_semantics = [#tpu.dimension_semantics<parallel>], iteration_bounds = array<i64: 2>, scalar_prefetch = 0 : i64, scratch_operands = 0 : i64, tpu.core_type = #tpu.core_type<tc>, window_params = [{transform_indices = @transform_0, window_bounds = array<i64: 16, 1>}, {transform_indices = @transform_1, window_bounds = array<i64: 16, 32>}, {pipeline_mode = #tpu.pipeline_mode<synchronous>, transform_indices = @transform_2, window_bounds = array<i64: 1, 128>}, {pipeline_mode = #tpu.pipeline_mode<synchronous>, transform_indices = @transform_3, window_bounds = array<i64: 1, 128>}, {pipeline_mode = #tpu.pipeline_mode<synchronous>, transform_indices = @transform_4, window_bounds = array<i64: 128, 128>}, {pipeline_mode = #tpu.pipeline_mode<synchronous>, transform_indices = @transform_5, window_bounds = array<i64: 1, 128>}, {pipeline_mode = #tpu.pipeline_mode<synchronous>, transform_indices = @transform_6, window_bounds = array<i64: 128, 32>}, {pipeline_mode = #tpu.pipeline_mode<synchronous>, transform_indices = @transform_7, window_bounds = array<i64: 1, 32>}, {transform_indices = @transform_8, window_bounds = array<i64: 16, 64>}]} {
    %c0 = arith.constant 0 : index
    %c0_0 = arith.constant 0 : index
    %0 = vector.load %arg1[%c0, %c0_0] : memref<16x1xf32, #tpu.memory_space<vmem>>, vector<16x1xf32>
    %c0_1 = arith.constant 0 : index
    %c0_2 = arith.constant 0 : index
    %1 = vector.load %arg3[%c0_1, %c0_2] : memref<1x128xf32, #tpu.memory_space<vmem>>, vector<1x128xf32>
    %2 = vector.broadcast %0 : vector<16x1xf32> to vector<16x128xf32>
    %3 = vector.broadcast %1 : vector<1x128xf32> to vector<16x128xf32>
    %4 = arith.mulf %2, %3 : vector<16x128xf32>
    %c0_3 = arith.constant 0 : index
    %c0_4 = arith.constant 0 : index
    %5 = vector.load %arg4[%c0_3, %c0_4] : memref<1x128xf32, #tpu.memory_space<vmem>>, vector<1x128xf32>
    %6 = vector.broadcast %5 : vector<1x128xf32> to vector<16x128xf32>
    %7 = arith.addf %4, %6 : vector<16x128xf32>
    %cst = arith.constant 0.000000e+00 : f32
    %8 = vector.broadcast %cst : f32 to vector<16x128xf32>
    %9 = arith.maximumf %7, %8 : vector<16x128xf32>
    %10 = arith.truncf %9 : vector<16x128xf32> to vector<16x128xbf16>
    %c0_5 = arith.constant 0 : index
    %c0_6 = arith.constant 0 : index
    %11 = vector.load %arg5[%c0_5, %c0_6] : memref<128x128xbf16, #tpu.memory_space<vmem>>, vector<128x128xbf16>
    %cst_7 = arith.constant dense<0.000000e+00> : vector<16x128xf32>
    %12 = tpu.matmul %10, %11, %cst_7 {dimension_numbers = #tpu.dot_dimension_numbers<[1], [0], [0], [1], [0, 0, 1, 1], [], []>} : vector<16x128xbf16>, vector<128x128xbf16>, vector<16x128xf32> -> vector<16x128xf32>
    %c0_8 = arith.constant 0 : index
    %c0_9 = arith.constant 0 : index
    %13 = vector.load %arg6[%c0_8, %c0_9] : memref<1x128xf32, #tpu.memory_space<vmem>>, vector<1x128xf32>
    %14 = vector.broadcast %13 : vector<1x128xf32> to vector<16x128xf32>
    %15 = arith.addf %12, %14 : vector<16x128xf32>
    %cst_10 = arith.constant 0.000000e+00 : f32
    %16 = vector.broadcast %cst_10 : f32 to vector<16x128xf32>
    %17 = arith.maximumf %15, %16 : vector<16x128xf32>
    %18 = arith.truncf %17 : vector<16x128xf32> to vector<16x128xbf16>
    %c0_11 = arith.constant 0 : index
    %c0_12 = arith.constant 0 : index
    %19 = vector.load %arg7[%c0_11, %c0_12] : memref<128x32xbf16, #tpu.memory_space<vmem>>, vector<128x32xbf16>
    %cst_13 = arith.constant dense<0.000000e+00> : vector<16x32xf32>
    %20 = tpu.matmul %18, %19, %cst_13 {dimension_numbers = #tpu.dot_dimension_numbers<[1], [0], [0], [1], [0, 0, 1, 1], [], []>} : vector<16x128xbf16>, vector<128x32xbf16>, vector<16x32xf32> -> vector<16x32xf32>
    %c0_14 = arith.constant 0 : index
    %c0_15 = arith.constant 0 : index
    %21 = vector.load %arg8[%c0_14, %c0_15] : memref<1x32xf32, #tpu.memory_space<vmem>>, vector<1x32xf32>
    %22 = vector.broadcast %21 : vector<1x32xf32> to vector<16x32xf32>
    %23 = arith.addf %20, %22 : vector<16x32xf32>
    %c0_16 = arith.constant 0 : index
    %c0_17 = arith.constant 0 : index
    %24 = vector.load %arg2[%c0_16, %c0_17] : memref<16x32xf32, #tpu.memory_space<vmem>>, vector<16x32xf32>
    %c0_18 = arith.constant 0 : index
    %c0_19 = arith.constant 0 : index
    %25 = vector.load %arg9[%c0_18, %c0_19] : memref<16x64xf32, #tpu.memory_space<vmem>>, vector<16x32xf32>
    tpu.vector_store %arg9[%c0_18, %c0_19], %24 {strides = array<i32>} : memref<16x64xf32, #tpu.memory_space<vmem>>, vector<16x32xf32>,
    %c0_20 = arith.constant 0 : index
    %c32 = arith.constant 32 : index
    %26 = vector.load %arg9[%c0_20, %c32] : memref<16x64xf32, #tpu.memory_space<vmem>>, vector<16x32xf32>
    tpu.vector_store %arg9[%c0_20, %c32], %23 {strides = array<i32>} : memref<16x64xf32, #tpu.memory_space<vmem>>, vector<16x32xf32>,
    return
  }
  func.func @transform_0(%arg0: i32) -> (i32, i32) {
    %c0_i32 = arith.constant 0 : i32
    %c0_i32_0 = arith.constant 0 : i32
    return %arg0, %c0_i32 : i32, i32
  }
  func.func @transform_1(%arg0: i32) -> (i32, i32) {
    %c0_i32 = arith.constant 0 : i32
    %c0_i32_0 = arith.constant 0 : i32
    return %arg0, %c0_i32 : i32, i32
  }
  func.func @transform_2(%arg0: i32) -> (i32, i32) {
    %c0_i32 = arith.constant 0 : i32
    %c0_i32_0 = arith.constant 0 : i32
    %c0_i32_1 = arith.constant 0 : i32
    return %c0_i32, %c0_i32_0 : i32, i32
  }
  func.func @transform_3(%arg0: i32) -> (i32, i32) {
    %c0_i32 = arith.constant 0 : i32
    %c0_i32_0 = arith.constant 0 : i32
    %c0_i32_1 = arith.constant 0 : i32
    return %c0_i32, %c0_i32_0 : i32, i32
  }
  func.func @transform_4(%arg0: i32) -> (i32, i32) {
    %c0_i32 = arith.constant 0 : i32
    %c0_i32_0 = arith.constant 0 : i32
    %c0_i32_1 = arith.constant 0 : i32
    return %c0_i32, %c0_i32_0 : i32, i32
  }
  func.func @transform_5(%arg0: i32) -> (i32, i32) {
    %c0_i32 = arith.constant 0 : i32
    %c0_i32_0 = arith.constant 0 : i32
    %c0_i32_1 = arith.constant 0 : i32
    return %c0_i32, %c0_i32_0 : i32, i32
  }
  func.func @transform_6(%arg0: i32) -> (i32, i32) {
    %c0_i32 = arith.constant 0 : i32
    %c0_i32_0 = arith.constant 0 : i32
    %c0_i32_1 = arith.constant 0 : i32
    return %c0_i32, %c0_i32_0 : i32, i32
  }
  func.func @transform_7(%arg0: i32) -> (i32, i32) {
    %c0_i32 = arith.constant 0 : i32
    %c0_i32_0 = arith.constant 0 : i32
    %c0_i32_1 = arith.constant 0 : i32
    return %c0_i32, %c0_i32_0 : i32, i32
  }
  func.func @transform_8(%arg0: i32) -> (i32, i32) {
    %c0_i32 = arith.constant 0 : i32
    %c0_i32_0 = arith.constant 0 : i32
    return %arg0, %c0_i32 : i32, i32
  }
}

</mosaic_0001>

<llo_original>
// kernel: tpu_custom_call.1
$region0: #{tpu_custom_call.1}
  #allocation0 [shape = 'u32[]', space=smem, size = 0x4, offset = 0x4, fixed_abs, tag = 'smem constant byte address 0x4 - core index']
  #allocation1 [shape = 'u32[144,128]{1,0:T(1,128)}', space=vmem, size = 0x12000, scoped, tag = 'internal scratch']
  %s0 = inlined_call_operand.vmem [shape: f32[32,1], index: 0, kind: input, shape index: {}]
  %s1 = inlined_call_operand.vmem [shape: f32[32,32], index: 1, kind: input, shape index: {}]
  %s2 = inlined_call_operand.vmem [shape: f32[1,128], index: 2, kind: input, shape index: {}]
  %s3 = inlined_call_operand.vmem [shape: f32[1,128], index: 3, kind: input, shape index: {}]
  %s4 = inlined_call_operand.vmem [shape: bf16[128,128], index: 4, kind: input, shape index: {}]
  %s5 = inlined_call_operand.vmem [shape: f32[1,128], index: 5, kind: input, shape index: {}]
  %s6 = inlined_call_operand.vmem [shape: bf16[128,32], index: 6, kind: input, shape index: {}]
  %s7 = inlined_call_operand.vmem [shape: f32[1,32], index: 7, kind: input, shape index: {}]
  %s8 = inlined_call_operand.hbm [shape: f32[32,64], index: 8, kind: output, shape index: {}]
  %s9 = sld [smem:[#allocation0]]
  $region65: #{tpu_custom_call.1} parent=0
    _
  %s11 = ssub.s32 1, %s9
  %s12 = scalar_select 0, %s11, %s9
  $region1: #{tpu_custom_call.1} parent=0
    #allocation2 [shape = 'u8[16384]{0}', space=vmem, size = 0x4000, scoped, tag = 'output window, operand 0']
    #allocation3 [shape = 's32[2]{0}', space=sflag, size = 0x8, scoped, tag = 'scoped memory for tpu_custom_call.1']
    %13 = vsyncpa [#allocation3], 0
    %s14 = scalar_lea.sflag [#allocation3], 1
    %15 = vsyncpa %s14, 0
    loop: start=0, step=1, limit=4
    $region2: #{tpu_custom_call.1} parent=1 // loop_pre_header
      _
    $region3: #{tpu_custom_call.1} parent=1 // loop_header
      %s17 = sphi 0, %s21
      %p18 = scmp.ge.s32.totalorder %s17, 4
      %s27 = sphi 0, %s29
      %s30 = sphi 0, %s27
      %s31 = sphi 0, %s30
      %s47 = sphi 0, %s31
      %s53 = sphi 0, %s55
      %s56 = sphi 0, %s53
      %s57 = sphi 0, %s56
      %s73 = sphi 0, %s57
      %s77 = sphi 0, %s77
      %s79 = sphi 0, %s77
      %s80 = sphi 0, %s79
      %s94 = sphi 0, %s80
      %s98 = sphi 0, %s98
      %s100 = sphi 0, %s98
      %s101 = sphi 0, %s100
      %s115 = sphi 0, %s101
      %s119 = sphi 0, %s119
      %s121 = sphi 0, %s119
      %s122 = sphi 0, %s121
      %s136 = sphi 0, %s122
      %s140 = sphi 0, %s140
      %s142 = sphi 0, %s140
      %s143 = sphi 0, %s142
      %s157 = sphi 0, %s143
      %s161 = sphi 0, %s161
      %s163 = sphi 0, %s161
      %s164 = sphi 0, %s163
      %s178 = sphi 0, %s164
      %s182 = sphi 0, %s182
      %s184 = sphi 0, %s182
      %s185 = sphi 0, %s184
      %s199 = sphi 0, %s185
      %s205 = sphi 0, %s207
      %s208 = sphi 0, %s205
      %s209 = sphi 0, %s208
      %s225 = sphi 0, %s209
    $region4: #{tpu_custom_call.1} parent=1 // loop_header_branch
      %20 = sbr.rel (%p18) target = $region8
    $region5: #{tpu_custom_call.1} parent=1 // loop_body
      %s22 = ssub.s32 %s17, 1
      %s23 = ssub.s32 %s17, 2
      %s24 = sadd.s32 %s17, 1
      %s25 = ssub.s32 %s17, %s24
      %p26 = scmp.eq.s32.totalorder %s25, 0
      %s28 = sadd.s32 %s27, 1
      %s29 = scalar_select %p26, %s27, %s28
      %p32 = pneg %p26
      %p33 = scmp.eq.s32.totalorder %s17, 1
      %p34 = por %p32, %p33
      %p35 = scmp.ne.s32.totalorder %s27, %s30
      %p36 = scmp.eq.s32.totalorder %s17, 0
      %p37 = por %p35, %p36
      %p38 = scmp.ne.s32.totalorder %s27, %s30
      %p39 = scmp.eq.s32.totalorder %s22, 1
      %p40 = por %p38, %p39
      %p41 = scmp.ne.s32.totalorder %s30, %s31
      %p42 = scmp.eq.s32.totalorder %s22, 0
      %p43 = por %p41, %p42
      %p44 = scmp.ne.s32.totalorder %s30, %s31
      %p45 = scmp.eq.s32.totalorder %s23, 1
      %p46 = por %p44, %p45
      %p48 = scmp.ne.s32.totalorder %s31, %s47
      %p49 = scmp.eq.s32.totalorder %s23, 0
      %p50 = por %p48, %p49
      %s51 = ssub.s32 %s17, %s24
      %p52 = scmp.eq.s32.totalorder %s51, 0
      %s54 = sadd.s32 %s53, 1
      %s55 = scalar_select %p52, %s53, %s54
      %p58 = pneg %p52
      %p59 = scmp.eq.s32.totalorder %s17, 1
      %p60 = por %p58, %p59
      %p61 = scmp.ne.s32.totalorder %s53, %s56
      %p62 = scmp.eq.s32.totalorder %s17, 0
      %p63 = por %p61, %p62
      %p64 = scmp.ne.s32.totalorder %s53, %s56
      %p65 = scmp.eq.s32.totalorder %s22, 1
      %p66 = por %p64, %p65
      %p67 = scmp.ne.s32.totalorder %s56, %s57
      %p68 = scmp.eq.s32.totalorder %s22, 0
      %p69 = por %p67, %p68
      %p70 = scmp.ne.s32.totalorder %s56, %s57
      %p71 = scmp.eq.s32.totalorder %s23, 1
      %p72 = por %p70, %p71
      %p74 = scmp.ne.s32.totalorder %s57, %s73
      %p75 = scmp.eq.s32.totalorder %s23, 0
      %p76 = por %p74, %p75
      %s78 = sadd.s32 %s77, 1
      %p81 = scmp.eq.s32.totalorder %s17, 1
      %p82 = scmp.ne.s32.totalorder %s77, %s79
      %p83 = scmp.eq.s32.totalorder %s17, 0
      %p84 = por %p82, %p83
      %p85 = scmp.ne.s32.totalorder %s77, %s79
      %p86 = scmp.eq.s32.totalorder %s22, 1
      %p87 = por %p85, %p86
      %p88 = scmp.ne.s32.totalorder %s79, %s80
      %p89 = scmp.eq.s32.totalorder %s22, 0
      %p90 = por %p88, %p89
      %p91 = scmp.ne.s32.totalorder %s79, %s80
      %p92 = scmp.eq.s32.totalorder %s23, 1
      %p93 = por %p91, %p92
      %p95 = scmp.ne.s32.totalorder %s80, %s94
      %p96 = scmp.eq.s32.totalorder %s23, 0
      %p97 = por %p95, %p96
      %s99 = sadd.s32 %s98, 1
      %p102 = scmp.eq.s32.totalorder %s17, 1
      %p103 = scmp.ne.s32.totalorder %s98, %s100
      %p104 = scmp.eq.s32.totalorder %s17, 0
      %p105 = por %p103, %p104
      %p106 = scmp.ne.s32.totalorder %s98, %s100
      %p107 = scmp.eq.s32.totalorder %s22, 1
      %p108 = por %p106, %p107
      %p109 = scmp.ne.s32.totalorder %s100, %s101
      %p110 = scmp.eq.s32.totalorder %s22, 0
      %p111 = por %p109, %p110
      %p112 = scmp.ne.s32.totalorder %s100, %s101
      %p113 = scmp.eq.s32.totalorder %s23, 1
      %p114 = por %p112, %p113
      %p116 = scmp.ne.s32.totalorder %s101, %s115
      %p117 = scmp.eq.s32.totalorder %s23, 0
      %p118 = por %p116, %p117
      %s120 = sadd.s32 %s119, 1
      %p123 = scmp.eq.s32.totalorder %s17, 1
      %p124 = scmp.ne.s32.totalorder %s119, %s121
      %p125 = scmp.eq.s32.totalorder %s17, 0
      %p126 = por %p124, %p125
      %p127 = scmp.ne.s32.totalorder %s119, %s121
      %p128 = scmp.eq.s32.totalorder %s22, 1
      %p129 = por %p127, %p128
      %p130 = scmp.ne.s32.totalorder %s121, %s122
      %p131 = scmp.eq.s32.totalorder %s22, 0
      %p132 = por %p130, %p131
      %p133 = scmp.ne.s32.totalorder %s121, %s122
      %p134 = scmp.eq.s32.totalorder %s23, 1
      %p135 = por %p133, %p134
      %p137 = scmp.ne.s32.totalorder %s122, %s136
      %p138 = scmp.eq.s32.totalorder %s23, 0
      %p139 = por %p137, %p138
      %s141 = sadd.s32 %s140, 1
      %p144 = scmp.eq.s32.totalorder %s17, 1
      %p145 = scmp.ne.s32.totalorder %s140, %s142
      %p146 = scmp.eq.s32.totalorder %s17, 0
      %p147 = por %p145, %p146
      %p148 = scmp.ne.s32.totalorder %s140, %s142
      %p149 = scmp.eq.s32.totalorder %s22, 1
      %p150 = por %p148, %p149
      %p151 = scmp.ne.s32.totalorder %s142, %s143
      %p152 = scmp.eq.s32.totalorder %s22, 0
      %p153 = por %p151, %p152
      %p154 = scmp.ne.s32.totalorder %s142, %s143
      %p155 = scmp.eq.s32.totalorder %s23, 1
      %p156 = por %p154, %p155
      %p158 = scmp.ne.s32.totalorder %s143, %s157
      %p159 = scmp.eq.s32.totalorder %s23, 0
      %p160 = por %p158, %p159
      %s162 = sadd.s32 %s161, 1
      %p165 = scmp.eq.s32.totalorder %s17, 1
      %p166 = scmp.ne.s32.totalorder %s161, %s163
      %p167 = scmp.eq.s32.totalorder %s17, 0
      %p168 = por %p166, %p167
      %p169 = scmp.ne.s32.totalorder %s161, %s163
      %p170 = scmp.eq.s32.totalorder %s22, 1
      %p171 = por %p169, %p170
      %p172 = scmp.ne.s32.totalorder %s163, %s164
      %p173 = scmp.eq.s32.totalorder %s22, 0
      %p174 = por %p172, %p173
      %p175 = scmp.ne.s32.totalorder %s163, %s164
      %p176 = scmp.eq.s32.totalorder %s23, 1
      %p177 = por %p175, %p176
      %p179 = scmp.ne.s32.totalorder %s164, %s178
      %p180 = scmp.eq.s32.totalorder %s23, 0
      %p181 = por %p179, %p180
      %s183 = sadd.s32 %s182, 1
      %p186 = scmp.eq.s32.totalorder %s17, 1
      %p187 = scmp.ne.s32.totalorder %s182, %s184
      %p188 = scmp.eq.s32.totalorder %s17, 0
      %p189 = por %p187, %p188
      %p190 = scmp.ne.s32.totalorder %s182, %s184
      %p191 = scmp.eq.s32.totalorder %s22, 1
      %p192 = por %p190, %p191
      %p193 = scmp.ne.s32.totalorder %s184, %s185
      %p194 = scmp.eq.s32.totalorder %s22, 0
      %p195 = por %p193, %p194
      %p196 = scmp.ne.s32.totalorder %s184, %s185
      %p197 = scmp.eq.s32.totalorder %s23, 1
      %p198 = por %p196, %p197
      %p200 = scmp.ne.s32.totalorder %s185, %s199
      %p201 = scmp.eq.s32.totalorder %s23, 0
      %p202 = por %p200, %p201
      %s203 = ssub.s32 %s17, %s24
      %p204 = scmp.eq.s32.totalorder %s203, 0
      %s206 = sadd.s32 %s205, 1
      %s207 = scalar_select %p204, %s205, %s206
      %p210 = pneg %p204
      %p211 = scmp.eq.s32.totalorder %s17, 1
      %p212 = por %p210, %p211
      %p213 = scmp.ne.s32.totalorder %s205, %s208
      %p214 = scmp.eq.s32.totalorder %s17, 0
      %p215 = por %p213, %p214
      %p216 = scmp.ne.s32.totalorder %s205, %s208
      %p217 = scmp.eq.s32.totalorder %s22, 1
      %p218 = por %p216, %p217
      %p219 = scmp.ne.s32.totalorder %s208, %s209
      %p220 = scmp.eq.s32.totalorder %s22, 0
      %p221 = por %p219, %p220
      %p222 = scmp.ne.s32.totalorder %s208, %s209
      %p223 = scmp.eq.s32.totalorder %s23, 1
      %p224 = por %p222, %p223
      %p226 = scmp.ne.s32.totalorder %s209, %s225
      %p227 = scmp.eq.s32.totalorder %s23, 0
      %p228 = por %p226, %p227
      %p229 = scmp.le.s32.totalorder 1, %s17
      %p230 = scmp.lt.s32.totalorder %s17, 3
      %p231 = pnand %p229, %p230
      %p232 = pneg %p231
      // Predicated region
      $region9: #{tpu_custom_call.1} parent=5 // pred_check
        _
      $region10: #{tpu_custom_call.1} parent=5 // pred_check_branch
        %234 = sbr.rel (%p231) target = $region12
      $region11: #{tpu_custom_call.1} parent=5 // pred_region
        %s235 = ssub.s32 %s17, 1
        // Predicated region
        $region13: #{tpu_custom_call.1} parent=11 // pred_check
          %p236 = pneg %p90
        $region14: #{tpu_custom_call.1} parent=11 // pred_check_branch
          %238 = sbr.rel (%p236) target = $region16
        $region15: #{tpu_custom_call.1} parent=11 // pred_region
          _
        $region16: #{tpu_custom_call.1} parent=11 // pred_fallthru
          _
        // Predicated region
        $region17: #{tpu_custom_call.1} parent=11 // pred_check
          %p239 = pneg %p111
        $region18: #{tpu_custom_call.1} parent=11 // pred_check_branch
          %241 = sbr.rel (%p239) target = $region20
        $region19: #{tpu_custom_call.1} parent=11 // pred_region
          _
        $region20: #{tpu_custom_call.1} parent=11 // pred_fallthru
          _
        // Predicated region
        $region21: #{tpu_custom_call.1} parent=11 // pred_check
          %p242 = pneg %p132
        $region22: #{tpu_custom_call.1} parent=11 // pred_check_branch
          %244 = sbr.rel (%p242) target = $region24
        $region23: #{tpu_custom_call.1} parent=11 // pred_region
          _
        $region24: #{tpu_custom_call.1} parent=11 // pred_fallthru
          _
        // Predicated region
        $region25: #{tpu_custom_call.1} parent=11 // pred_check
          %p245 = pneg %p153
        $region26: #{tpu_custom_call.1} parent=11 // pred_check_branch
          %247 = sbr.rel (%p245) target = $region28
        $region27: #{tpu_custom_call.1} parent=11 // pred_region
          _
        $region28: #{tpu_custom_call.1} parent=11 // pred_fallthru
          _
        // Predicated region
        $region29: #{tpu_custom_call.1} parent=11 // pred_check
          %p248 = pneg %p174
        $region30: #{tpu_custom_call.1} parent=11 // pred_check_branch
          %250 = sbr.rel (%p248) target = $region32
        $region31: #{tpu_custom_call.1} parent=11 // pred_region
          _
        $region32: #{tpu_custom_call.1} parent=11 // pred_fallthru
          _
        // Predicated region
        $region33: #{tpu_custom_call.1} parent=11 // pred_check
          %p251 = pneg %p195
        $region34: #{tpu_custom_call.1} parent=11 // pred_check_branch
          %253 = sbr.rel (%p251) target = $region36
        $region35: #{tpu_custom_call.1} parent=11 // pred_region
          _
        $region36: #{tpu_custom_call.1} parent=11 // pred_fallthru
          _
      $region12: #{tpu_custom_call.1} parent=5 // pred_fallthru
        _
      %p254 = scmp.lt.s32.totalorder %s17, 2
      // Predicated region
      $region37: #{tpu_custom_call.1} parent=5 // pred_check
        %p255 = pneg %p254
      $region38: #{tpu_custom_call.1} parent=5 // pred_check_branch
        %257 = sbr.rel (%p255) target = $region40
      $region39: #{tpu_custom_call.1} parent=5 // pred_region
        // Predicated region
        $region41: #{tpu_custom_call.1} parent=39 // pred_check
          %p258 = pneg %p37
        $region42: #{tpu_custom_call.1} parent=39 // pred_check_branch
          %260 = sbr.rel (%p258) target = $region44
        $region43: #{tpu_custom_call.1} parent=39 // pred_region
          %s261 = smul.u32 2, %s17
          %p262 = scmp.lt.s32.totalorder %s261, 3
          %s263 = scalar_select %p262, %s261, 3
          %s264 = smul.addr %s263, 8
          %s265 = scalar_lea.vmem %s0, %s264
          %s266 = smul.u32 2, %s17
        $region44: #{tpu_custom_call.1} parent=39 // pred_fallthru
          _
        // Predicated region
        $region45: #{tpu_custom_call.1} parent=39 // pred_check
          %p267 = pneg %p63
        $region46: #{tpu_custom_call.1} parent=39 // pred_check_branch
          %269 = sbr.rel (%p267) target = $region48
        $region47: #{tpu_custom_call.1} parent=39 // pred_region
          %s270 = smul.u32 2, %s17
          %p271 = scmp.lt.s32.totalorder %s270, 3
          %s272 = scalar_select %p271, %s270, 3
          %s273 = smul.addr %s272, 8
          %s274 = scalar_lea.vmem %s1, %s273
          %s275 = smul.u32 2, %s17
        $region48: #{tpu_custom_call.1} parent=39 // pred_fallthru
          _
      $region40: #{tpu_custom_call.1} parent=5 // pred_fallthru
        _
      %p276 = scmp.le.s32.totalorder 1, %s17
      %p277 = scmp.lt.s32.totalorder %s17, 3
      %p278 = pnand %p276, %p277
      %p279 = pneg %p278
      // Predicated region
      $region49: #{tpu_custom_call.1} parent=5 // pred_check
        _
      $region50: #{tpu_custom_call.1} parent=5 // pred_check_branch
        %281 = sbr.rel (%p278) target = $region52
      $region51: #{tpu_custom_call.1} parent=5 // pred_region
        %s282 = ssub.s32 %s17, 1
        %s283 = smul.u32 2, %s22
        %p284 = scmp.lt.s32.totalorder %s283, 3
        %s285 = scalar_select %p284, %s283, 3
        %s286 = smul.addr %s285, 8
        %s287 = scalar_lea.vmem %s0, %s286
        %p288 = pneg %p43
        %p289 = pneg %p40
        %s290 = smul.u32 2, %s22
        %p291 = scmp.lt.s32.totalorder %s290, 3
        %s292 = scalar_select %p291, %s290, 3
        %s293 = smul.addr %s292, 8
        %s294 = scalar_lea.vmem %s1, %s293
        %p295 = pneg %p69
        %p296 = pneg %p66
        %p297 = pneg %p90
        %p298 = pneg %p87
        %p299 = pneg %p111
        %p300 = pneg %p108
        %p301 = pneg %p132
        %p302 = pneg %p129
        %p303 = pneg %p153
        %p304 = pneg %p150
        %p305 = pneg %p174
        %p306 = pneg %p171
        %p307 = pneg %p195
        %p308 = pneg %p192
        %p309 = pneg %p221
        %p310 = pneg %p218
        %s311 = sand.u32 %s208, 1
        %s312 = scalar_lea.sflag [#allocation3], %s311
        %s313 = sand.u32 %s208, 1
        %s314 = smul.addr %s313, 16
        %s315 = scalar_lea.vmem [#allocation2], %s314
        %s316 = smul.u32 2, %s22
        %p317 = scmp.lt.s32.totalorder %s316, 3
        %s318 = scalar_select %p317, %s316, 3
        %s319 = smul.addr %s318, 8
        %s320 = scalar_lea.vmem %s0, %s319
        %s321 = smul.u32 2, %s22
        %s322 = smul.u32 2, %s22
        %p323 = scmp.lt.s32.totalorder %s322, 3
        %s324 = scalar_select %p323, %s322, 3
        %s325 = smul.addr %s324, 8
        %s326 = scalar_lea.vmem %s1, %s325
        %s327 = smul.u32 2, %s22
        %s328 = smul.u32 2, %s22
        %v330 = vld [vmem:[%s320] sm:$0xff]
        %v331 = vld [vmem:[%s320 + $0x8] sm:$0xff]
        %v332 = vld [vmem:[%s2] sm:$0x1]
        %334 = vset.pattern.permute.xlu0 0
        %335 = vperm.xlu0 %334, %v330
        %v336 = vpop.permute.xlu0 %335
        %339 = vset.pattern.permute.xlu0 0
        %340 = vperm.xlu0 %339, %v331
        %v341 = vpop.permute.xlu0 %340
        %v344 = vlaneseq
        %v345 = vshrl.u32 %v344, 7
        %v346 = vsub.s32 0, %v345
        %v347 = vrot.slane %v332, %v346
        %v349 = vmul.f32 %v336, %v347
        %v350 = vmul.f32 %v341, %v347
        %v351 = vld [vmem:[%s3] sm:$0x1]
        %v353 = vlaneseq
        %v354 = vshrl.u32 %v353, 7
        %v355 = vsub.s32 0, %v354
        %v356 = vrot.slane %v351, %v355
        %v358 = vadd.f32 %v349, %v356
        %v359 = vadd.f32 %v350, %v356
        %v360 = vmax.f32 %v358, 0.0
        %v361 = vmax.f32 %v359, 0.0
        %v362 = vpack.c.bf16 %v361, %v360
        %v363 = vld [vmem:[%s4] sm:$0xf]
        %v364 = vld [vmem:[%s4 + $0x4] sm:$0xf]
        %v365 = vld [vmem:[%s4 + $0x8] sm:$0xf]
        %v366 = vld [vmem:[%s4 + $0xc] sm:$0xf]
        %v367 = vld [vmem:[%s4 + $0x10] sm:$0xf]
        %v368 = vld [vmem:[%s4 + $0x14] sm:$0xf]
        %v369 = vld [vmem:[%s4 + $0x18] sm:$0xf]
        %v370 = vld [vmem:[%s4 + $0x1c] sm:$0xf]
        %v371 = vld [vmem:[%s4 + $0x20] sm:$0xf]
        %v372 = vld [vmem:[%s4 + $0x24] sm:$0xf]
        %v373 = vld [vmem:[%s4 + $0x28] sm:$0xf]
        %v374 = vld [vmem:[%s4 + $0x2c] sm:$0xf]
        %v375 = vld [vmem:[%s4 + $0x30] sm:$0xf]
        %v376 = vld [vmem:[%s4 + $0x34] sm:$0xf]
        %v377 = vld [vmem:[%s4 + $0x38] sm:$0xf]
        %v378 = vld [vmem:[%s4 + $0x3c] sm:$0xf]
        %v379 = vld [vmem:[%s5] sm:$0x1]
        %v381 = vlaneseq
        %v382 = vshrl.u32 %v381, 7
        %v383 = vsub.s32 0, %v382
        %v384 = vrot.slane %v379, %v383
        %v402 = vunpack.c.l.b16 %v363
        %v403 = vunpack.c.l.b16 %v364
        %v404 = vunpack.c.l.b16 %v365
        %v405 = vunpack.c.l.b16 %v366
        %v406 = vunpack.c.l.b16 %v367
        %v407 = vunpack.c.l.b16 %v368
        %v408 = vunpack.c.l.b16 %v369
        %v409 = vunpack.c.l.b16 %v370
        %v410 = vunpack.c.l.b16 %v371
        %v411 = vunpack.c.l.b16 %v372
        %v412 = vunpack.c.l.b16 %v373
        %v413 = vunpack.c.l.b16 %v374
        %v414 = vunpack.c.l.b16 %v375
        %v415 = vunpack.c.l.b16 %v376
        %v416 = vunpack.c.l.b16 %v377
        %v417 = vunpack.c.l.b16 %v378
        %v418 = vpack.c.b16 %v403, %v402
        %v419 = vpack.c.b16 %v405, %v404
        %v420 = vpack.c.b16 %v407, %v406
        %v421 = vpack.c.b16 %v409, %v408
        %v422 = vpack.c.b16 %v411, %v410
        %v423 = vpack.c.b16 %v413, %v412
        %v424 = vpack.c.b16 %v415, %v414
        %v425 = vpack.c.b16 %v417, %v416
        %434 = vmatprep.subr.bf16.mxu0 0
        %435 = vmatpush1.bf16.msra.mxu0 %v418
        %436 = vmatprep.subr.bf16.mxu0 0
        %437 = vmatpush1.bf16.msra.mxu0 %v419
        %438 = vmatprep.subr.bf16.mxu0 0
        %439 = vmatpush1.bf16.msra.mxu0 %v420
        %440 = vmatprep.subr.bf16.mxu0 0
        %441 = vmatpush1.bf16.msra.mxu0 %v421
        %442 = vmatprep.subr.bf16.mxu0 0
        %443 = vmatpush1.bf16.msra.mxu0 %v422
        %444 = vmatprep.subr.bf16.mxu0 0
        %445 = vmatpush1.bf16.msra.mxu0 %v423
        %446 = vmatprep.subr.bf16.mxu0 0
        %447 = vmatpush1.bf16.msra.mxu0 %v424
        %448 = vmatprep.subr.bf16.mxu0 0
        %449 = vmatpush1.bf16.msra.mxu0 %v425
        %450 = vmatprep.subr.bf16.mxu0 0
        %451 = vmatpush1.bf16.msra.mxu0 0
        %452 = vmatprep.subr.bf16.mxu0 0
        %453 = vmatpush1.bf16.msra.mxu0 0
        %454 = vmatprep.subr.bf16.mxu0 0
        %455 = vmatpush1.bf16.msra.mxu0 0
        %456 = vmatprep.subr.bf16.mxu0 0
        %457 = vmatpush1.bf16.msra.mxu0 0
        %458 = vmatprep.subr.bf16.mxu0 0
        %459 = vmatpush1.bf16.msra.mxu0 0
        %460 = vmatprep.subr.bf16.mxu0 0
        %461 = vmatpush1.bf16.msra.mxu0 0
        %462 = vmatprep.subr.bf16.mxu0 0
        %463 = vmatpush1.bf16.msra.mxu0 0
        %464 = vmatprep.subr.bf16.mxu0 0
        %465 = vmatpush1.bf16.msra.mxu0 0
        %466 = vmatprep.mubr.bf16.mxu0 0
        %467 = vmatmul.mubr.bf16.gmra.mrb[0].mxu0 %v362
        %v468 = vpop.f32.mrb[0].mxu0
        %v469 = vadd.f32 %v384, %v468
        %v470 = vpop.f32.mrb[0].mxu0
        %v471 = vpop.f32.mrb[0].mxu0
        %v472 = vadd.f32 %v384, %v471
        %v473 = vpop.f32.mrb[0].mxu0
        %474 = vdwg.mxu0
        %v475 = vmax.f32 %v469, 0.0
        %v476 = vmax.f32 %v472, 0.0
        %v477 = vpack.c.bf16 %v476, %v475
        %v478 = vld [vmem:[%s6] sm:$0xf]
        %v479 = vld [vmem:[%s6 + $0x4] sm:$0xf]
        %v480 = vld [vmem:[%s6 + $0x8] sm:$0xf]
        %v481 = vld [vmem:[%s6 + $0xc] sm:$0xf]
        %v482 = vld [vmem:[%s6 + $0x10] sm:$0xf]
        %v483 = vld [vmem:[%s6 + $0x14] sm:$0xf]
        %v484 = vld [vmem:[%s6 + $0x18] sm:$0xf]
        %v485 = vld [vmem:[%s6 + $0x1c] sm:$0xf]
        %v486 = vld [vmem:[%s6 + $0x20] sm:$0xf]
        %v487 = vld [vmem:[%s6 + $0x24] sm:$0xf]
        %v488 = vld [vmem:[%s6 + $0x28] sm:$0xf]
        %v489 = vld [vmem:[%s6 + $0x2c] sm:$0xf]
        %v490 = vld [vmem:[%s6 + $0x30] sm:$0xf]
        %v491 = vld [vmem:[%s6 + $0x34] sm:$0xf]
        %v492 = vld [vmem:[%s6 + $0x38] sm:$0xf]
        %v493 = vld [vmem:[%s6 + $0x3c] sm:$0xf]
        %v494 = vld [vmem:[%s7] sm:$0x1]
        %v496 = vlaneseq
        %v497 = vshrl.u32 %v496, 7
        %v498 = vsub.s32 0, %v497
        %v499 = vrot.slane %v494, %v498
        %v517 = vunpack.c.l.b16 %v478
        %v518 = vunpack.c.l.b16 %v479
        %v519 = vunpack.c.l.b16 %v480
        %v520 = vunpack.c.l.b16 %v481
        %v521 = vunpack.c.l.b16 %v482
        %v522 = vunpack.c.l.b16 %v483
        %v523 = vunpack.c.l.b16 %v484
        %v524 = vunpack.c.l.b16 %v485
        %v525 = vunpack.c.l.b16 %v486
        %v526 = vunpack.c.l.b16 %v487
        %v527 = vunpack.c.l.b16 %v488
        %v528 = vunpack.c.l.b16 %v489
        %v529 = vunpack.c.l.b16 %v490
        %v530 = vunpack.c.l.b16 %v491
        %v531 = vunpack.c.l.b16 %v492
        %v532 = vunpack.c.l.b16 %v493
        %v533 = vpack.c.b16 %v518, %v517
        %v534 = vpack.c.b16 %v520, %v519
        %v535 = vpack.c.b16 %v522, %v521
        %v536 = vpack.c.b16 %v524, %v523
        %v537 = vpack.c.b16 %v526, %v525
        %v538 = vpack.c.b16 %v528, %v527
        %v539 = vpack.c.b16 %v530, %v529
        %v540 = vpack.c.b16 %v532, %v531
        %549 = vmatprep.subr.bf16.mxu0 0
        %550 = vmatpush1.bf16.msra.mxu0 %v533
        %551 = vmatprep.subr.bf16.mxu0 0
        %552 = vmatpush1.bf16.msra.mxu0 %v534
        %553 = vmatprep.subr.bf16.mxu0 0
        %554 = vmatpush1.bf16.msra.mxu0 %v535
        %555 = vmatprep.subr.bf16.mxu0 0
        %556 = vmatpush1.bf16.msra.mxu0 %v536
        %557 = vmatprep.subr.bf16.mxu0 0
        %558 = vmatpush1.bf16.msra.mxu0 %v537
        %559 = vmatprep.subr.bf16.mxu0 0
        %560 = vmatpush1.bf16.msra.mxu0 %v538
        %561 = vmatprep.subr.bf16.mxu0 0
        %562 = vmatpush1.bf16.msra.mxu0 %v539
        %563 = vmatprep.subr.bf16.mxu0 0
        %564 = vmatpush1.bf16.msra.mxu0 %v540
        %565 = vmatprep.subr.bf16.mxu0 0
        %566 = vmatpush1.bf16.msra.mxu0 0
        %567 = vmatprep.subr.bf16.mxu0 0
        %568 = vmatpush1.bf16.msra.mxu0 0
        %569 = vmatprep.subr.bf16.mxu0 0
        %570 = vmatpush1.bf16.msra.mxu0 0
        %571 = vmatprep.subr.bf16.mxu0 0
        %572 = vmatpush1.bf16.msra.mxu0 0
        %573 = vmatprep.subr.bf16.mxu0 0
        %574 = vmatpush1.bf16.msra.mxu0 0
        %575 = vmatprep.subr.bf16.mxu0 0
        %576 = vmatpush1.bf16.msra.mxu0 0
        %577 = vmatprep.subr.bf16.mxu0 0
        %578 = vmatpush1.bf16.msra.mxu0 0
        %579 = vmatprep.subr.bf16.mxu0 0
        %580 = vmatpush1.bf16.msra.mxu0 0
        %581 = vmatprep.mubr.bf16.mxu0 0
        %582 = vmatmul.mubr.bf16.gmra.mrb[0].mxu0 %v477
        %v583 = vpop.f32.mrb[0].mxu0
        %v584 = vadd.f32 %v499, %v583
        %v585 = vpop.f32.mrb[0].mxu0
        %v586 = vpop.f32.mrb[0].mxu0
        %v587 = vadd.f32 %v499, %v586
        %v588 = vpop.f32.mrb[0].mxu0
        %589 = vdwg.mxu0
        %v590 = vld [vmem:[%s326] sm:$0xff]
        %v591 = vld [vmem:[%s326 + $0x8] sm:$0xff]
        %vm592 = vcmask 261120
        %593 = vst.msk [vmem:[%s315] sm:$0xff] %vm592, %v590
        %594 = vst.msk [vmem:[%s315 + $0x8] sm:$0xff] %vm592, %v591
        %597 = vrot.lane.b32.xlu0 %v584, 32
        %v598 = vpop.permute.xlu0 %597
        %599 = vrot.lane.b32.xlu0 %v587, 32
        %v600 = vpop.permute.xlu0 %599
        %vm603 = vcmask 523520
        %604 = vst.msk [vmem:[%s315] sm:$0xff] %vm603, %v598
        %605 = vst.msk [vmem:[%s315 + $0x8] sm:$0xff] %vm603, %v600
        %s606 = sand.u32 %s208, 1
        %s607 = scalar_lea.sflag [#allocation3], %s606
        %s608 = sand.u32 %s208, 1
        %s609 = smul.addr %s608, 16
        %s610 = scalar_lea.vmem [#allocation2], %s609
        // Predicated region
        $region53: #{tpu_custom_call.1} parent=51 // pred_check
          %p611 = pneg %p218
        $region54: #{tpu_custom_call.1} parent=51 // pred_check_branch
          %613 = sbr.rel (%p611) target = $region56
        $region55: #{tpu_custom_call.1} parent=51 // pred_region
          %s614 = smul.u32 2, %s22
          %s616 = ssub.s32 256, 256
          %617 = vsyncadd %s607, %s616
          %s618 = smul.addr %s614, 128
          %s619 = scalar_lea.hbm %s8, %s618
          %s620 = sshll.u32 %s610, 4
          %s621 = int_to_ptr.vmem [resolvable:$true] %s620
          %626 = dma.vmem_to_hbm [thread:$0]  %s621, 256, %s619, %s607, 128, 128, 8
        $region56: #{tpu_custom_call.1} parent=51 // pred_fallthru
          _
      $region52: #{tpu_custom_call.1} parent=5 // pred_fallthru
        _
      %p627 = scmp.le.s32.totalorder 2, %s17
      // Predicated region
      $region57: #{tpu_custom_call.1} parent=5 // pred_check
        %p628 = pneg %p627
      $region58: #{tpu_custom_call.1} parent=5 // pred_check_branch
        %630 = sbr.rel (%p628) target = $region60
      $region59: #{tpu_custom_call.1} parent=5 // pred_region
        %s631 = ssub.s32 %s17, 2
        // Predicated region
        $region61: #{tpu_custom_call.1} parent=59 // pred_check
          %p632 = pneg %p224
        $region62: #{tpu_custom_call.1} parent=59 // pred_check_branch
          %634 = sbr.rel (%p632) target = $region64
        $region63: #{tpu_custom_call.1} parent=59 // pred_region
          %s635 = sand.u32 %s209, 1
          %s636 = scalar_lea.sflag [#allocation3], %s635
          %s637 = sand.u32 %s209, 1
          %s638 = smul.addr %s637, 16
          %s639 = scalar_lea.vmem [#allocation2], %s638
          %640 = dma.done %s636, 256
        $region64: #{tpu_custom_call.1} parent=59 // pred_fallthru
          _
      $region60: #{tpu_custom_call.1} parent=5 // pred_fallthru
        _
    $region6: #{tpu_custom_call.1} parent=1 // loop_footer
      %s21 = sadd.s32 1, %s17
    $region7: #{tpu_custom_call.1} parent=1 // loop_footer_branch
      %16 = sbr.rel target = $region3
    $region8: #{tpu_custom_call.1} parent=1 // loop_exit
      _
    %641 = vsyncpa [#allocation3], 1
    %s642 = scalar_lea.sflag [#allocation3], 1
    %643 = vsyncpa %s642, 1

</llo_original>
